<compile_context>
chip_gen: v5e
topology: v5e:2x2
jax: 0.10.0
libtpu: 0.0.40
codegen_flags: <defaults>
</compile_context>

<pallas_src>
import jax
import jax.numpy as jnp
from jax.experimental import pallas as pl
from jax.experimental.pallas import tpu as pltpu


def _gfi_kernel(src_ref, ref_ref, w1t_ref, w1b_ref, w2_ref, w3_ref, out_ref):
    # src/ref tiles: (tb, L); weights: (L, 2*mid), (L, 2*mid), (2*mid, 2*mid),
    # (2*mid, 2*out).  Output tile: (tb, 2*out) = [Hx | Hy] lane-packed.
    cdt = w1t_ref.dtype                      # MXU compute dtype (bf16 default)
    s = src_ref[...].astype(cdt)
    r = ref_ref[...].astype(cdt)

    # Layer 1 (both paths at once, concat-free in K):
    #   [hx1 | hy1] = s @ [w1a|w1b] + r @ [w1b|w1a]
    h = (jnp.dot(s, w1t_ref[...], preferred_element_type=jnp.float32)
         + jnp.dot(r, w1b_ref[...], preferred_element_type=jnp.float32))
    h = jnp.maximum(h, 0.0)                  # (tb, 2*mid) f32

    # Layer 2: block-diagonal weight keeps the two paths independent.
    h = jnp.dot(h.astype(cdt), w2_ref[...], preferred_element_type=jnp.float32)
    h = jnp.maximum(h, 0.0)                  # (tb, 2*mid) f32

    # Layer 3.
    h = jnp.dot(h.astype(cdt), w3_ref[...], preferred_element_type=jnp.float32)
    h = jnp.maximum(h, 0.0)                  # (tb, 2*out) f32

    out_ref[...] = h.astype(out_ref.dtype)   # lane-dense store


def _round_up(x, m):
    return ((x + m - 1) // m) * m


def _block_diag2(w):
    z = jnp.zeros(w.shape, w.dtype)
    top = jnp.concatenate([w, z], axis=1)
    bot = jnp.concatenate([z, w], axis=1)
    return jnp.concatenate([top, bot], axis=0)


def gfi(source_feature, reference_feature, w1, w2, w3, *,
        block_b=None, compute_dtype=jnp.bfloat16):
    """source_feature, reference_feature: [B, 1, L].

    w1: [2L, mid], w2: [mid, mid], w3: [mid, out]  (x @ W layout, no bias).
    Returns (Hx, Hy), each [B, 1, out].
    """
    assert source_feature.shape == reference_feature.shape
    B, S, L = source_feature.shape
    assert S == 1
    assert w1.shape[0] == 2 * L
    mid = w1.shape[1]
    assert w2.shape == (mid, mid)
    assert w3.shape[0] == mid
    out_f = w3.shape[1]
    dtype = source_feature.dtype

    # Drop the singleton point dim: the kernel works on 2-D [B, L] slabs.
    src2d = source_feature.reshape(B, L)
    ref2d = reference_feature.reshape(B, L)

    # One-time weight restructuring (tiny) so Hx/Hy share every dot.
    w1a = w1[:L, :]
    w1b = w1[L:, :]
    w1_top = jnp.concatenate([w1a, w1b], axis=1).astype(compute_dtype)   # (L, 2*mid)
    w1_bot = jnp.concatenate([w1b, w1a], axis=1).astype(compute_dtype)   # (L, 2*mid)
    w2_big = _block_diag2(w2).astype(compute_dtype)                      # (2*mid, 2*mid)
    w3_big = _block_diag2(w3).astype(compute_dtype)                      # (2*mid, 2*out)

    act_bytes = jnp.dtype(compute_dtype).itemsize
    io_bytes = jnp.dtype(dtype).itemsize

    # VMEM bytes proportional to one batch row of a tile: double-buffered
    # src/ref input tiles + double-buffered lane-packed output tile + in-kernel
    # temporaries (bf16 casts of s/r, f32 + bf16 copies of the fused h).
    row_bytes = (2 * 2 * L * io_bytes          # src + ref tiles, 2 buffers each
                 + 2 * 2 * out_f * io_bytes    # packed output tile, 2 buffers
                 + 2 * L * act_bytes           # in-kernel s/r casts
                 + 2 * max(mid, out_f) * 6)    # f32 h + bf16 recast

    if block_b is None:
        budget = 8 << 20                       # ~8 MiB of row-proportional VMEM
        bb = min(1024, max(8, budget // max(row_bytes, 1)))
        if B >= 16:
            # Keep >= 2 grid steps so "parallel" can shard the batch across
            # both TensorCores on v7x.
            bb = min(bb, _round_up(pl.cdiv(B, 2), 8))
        if bb >= B:
            bb = B                             # single step; full-dim block is legal
        else:
            bb = max(8, (bb // 8) * 8)         # (8,128) block-shape rule
        block_b = bb
    else:
        block_b = min(block_b, B)
        if block_b != B:
            block_b = max(8, (block_b // 8) * 8)

    grid = (pl.cdiv(B, block_b),)

    weight_bytes = (2 * L * 2 * mid + (2 * mid) ** 2 + 2 * mid * 2 * out_f) * act_bytes
    vmem_limit = int(min(64 << 20,
                         max(32 << 20,
                             2 * weight_bytes + block_b * row_bytes + (8 << 20))))

    x_spec = pl.BlockSpec((block_b, L), lambda i: (i, 0))
    out_spec = pl.BlockSpec((block_b, 2 * out_f), lambda i: (i, 0))

    def w_spec(shape):
        return pl.BlockSpec(shape, lambda i: (0, 0))

    # TODO(synk): for very large mid/out_features add a grid axis over the
    # output-feature dim (128-512 wide N tiles) so weight + output VMEM stays
    # bounded on v7x's 64 MiB (not needed at these sizes).

    packed = pl.pallas_call(
        _gfi_kernel,
        out_shape=jax.ShapeDtypeStruct((B, 2 * out_f), dtype),
        grid=grid,
        in_specs=[
            x_spec, x_spec,
            w_spec((L, 2 * mid)), w_spec((L, 2 * mid)),
            w_spec((2 * mid, 2 * mid)), w_spec((2 * mid, 2 * out_f)),
        ],
        out_specs=out_spec,
        compiler_params=pltpu.CompilerParams(
            dimension_semantics=("parallel",),
            vmem_limit_bytes=vmem_limit,
        ),
    )(src2d, ref2d, w1_top, w1_bot, w2_big, w3_big)

    hx = packed[:, :out_f].reshape(B, 1, out_f)
    hy = packed[:, out_f:].reshape(B, 1, out_f)
    return hx, hy


def _gfi_reference(source_feature, reference_feature, w1, w2, w3,
                   compute_dtype=jnp.float32):
    # Pure-JAX reference mirroring the PyTorch forward (optionally with the
    # same bf16 matmul-operand casts the kernel uses, f32 accumulation).
    def block(x):
        for w in (w1, w2, w3):
            x = jnp.maximum(
                jnp.dot(x.astype(compute_dtype), w.astype(compute_dtype),
                        preferred_element_type=jnp.float32), 0.0)
        return x

    sr = jnp.concatenate([source_feature, reference_feature], axis=2)
    rs = jnp.concatenate([reference_feature, source_feature], axis=2)
    return block(sr), block(rs)


if __name__ == "__main__":
    key = jax.random.PRNGKey(0)
    k1, k2, k3, k4, k5 = jax.random.split(key, 5)

    # Small demo shapes: batch=2, per-cloud feature L=32 -> in_features=64,
    # out_features=64, middle_features=32 (matches GFI(in=64, out=64)).
    B, L = 2, 32
    in_features = 2 * L
    out_features = 64
    mid = out_features // 2

    source_feature = jax.random.normal(k1, (B, 1, L), dtype=jnp.float32)
    reference_feature = jax.random.normal(k2, (B, 1, L), dtype=jnp.float32)

    # Linear weights (bias=False), stored as [in, out] for x @ W.
    w1 = jax.random.normal(k3, (in_features, mid), jnp.float32) * (in_features ** -0.5)
    w2 = jax.random.normal(k4, (mid, mid), jnp.float32) * (mid ** -0.5)
    w3 = jax.random.normal(k5, (mid, out_features), jnp.float32) * (mid ** -0.5)

    hx, hy = gfi(source_feature, reference_feature, w1, w2, w3)
    jax.block_until_ready((hx, hy))

    # Tight check vs a reference using the same bf16 operands / f32 accumulation,
    # loose check vs the pure-f32 reference.
    hx_bf, hy_bf = _gfi_reference(source_feature, reference_feature, w1, w2, w3,
                                  compute_dtype=jnp.bfloat16)
    hx_f32, hy_f32 = _gfi_reference(source_feature, reference_feature, w1, w2, w3)

    assert hx.shape == (B, 1, out_features)
    assert hy.shape == (B, 1, out_features)
    assert jnp.allclose(hx, hx_bf, atol=3e-2, rtol=3e-2)
    assert jnp.allclose(hy, hy_bf, atol=3e-2, rtol=3e-2)
    assert jnp.allclose(hx, hx_f32, atol=1e-1, rtol=1e-1)
    assert jnp.allclose(hy, hy_f32, atol=1e-1, rtol=1e-1)

    print("KERNEL_OK")
</pallas_src>

<mosaic_0001>
module attributes {stable_mosaic.version = 11 : i64} {
  func.func @_gfi_kernel(%arg0: i32, %arg1: memref<2x32xf32, #tpu.memory_space<vmem>>, %arg2: memref<2x32xf32, #tpu.memory_space<vmem>>, %arg3: memref<32x64xbf16, #tpu.memory_space<vmem>>, %arg4: memref<32x64xbf16, #tpu.memory_space<vmem>>, %arg5: memref<64x64xbf16, #tpu.memory_space<vmem>>, %arg6: memref<64x128xbf16, #tpu.memory_space<vmem>>, %arg7: memref<2x128xf32, #tpu.memory_space<vmem>>) attributes {dimension_semantics = [#tpu.dimension_semantics<parallel>], iteration_bounds = array<i64: 1>, scalar_prefetch = 0 : i64, scratch_operands = 0 : i64, tpu.core_type = #tpu.core_type<tc>, window_params = [{transform_indices = @transform_0, window_bounds = array<i64: 2, 32>}, {transform_indices = @transform_1, window_bounds = array<i64: 2, 32>}, {pipeline_mode = #tpu.pipeline_mode<synchronous>, transform_indices = @transform_2, window_bounds = array<i64: 32, 64>}, {pipeline_mode = #tpu.pipeline_mode<synchronous>, transform_indices = @transform_3, window_bounds = array<i64: 32, 64>}, {pipeline_mode = #tpu.pipeline_mode<synchronous>, transform_indices = @transform_4, window_bounds = array<i64: 64, 64>}, {pipeline_mode = #tpu.pipeline_mode<synchronous>, transform_indices = @transform_5, window_bounds = array<i64: 64, 128>}, {transform_indices = @transform_6, window_bounds = array<i64: 2, 128>}]} {
    %c0 = arith.constant 0 : index
    %c0_0 = arith.constant 0 : index
    %0 = vector.load %arg1[%c0, %c0_0] : memref<2x32xf32, #tpu.memory_space<vmem>>, vector<2x32xf32>
    %1 = arith.truncf %0 : vector<2x32xf32> to vector<2x32xbf16>
    %c0_1 = arith.constant 0 : index
    %c0_2 = arith.constant 0 : index
    %2 = vector.load %arg2[%c0_1, %c0_2] : memref<2x32xf32, #tpu.memory_space<vmem>>, vector<2x32xf32>
    %3 = arith.truncf %2 : vector<2x32xf32> to vector<2x32xbf16>
    %c0_3 = arith.constant 0 : index
    %c0_4 = arith.constant 0 : index
    %4 = vector.load %arg3[%c0_3, %c0_4] : memref<32x64xbf16, #tpu.memory_space<vmem>>, vector<32x64xbf16>
    %cst = arith.constant dense<0.000000e+00> : vector<2x64xf32>
    %5 = tpu.matmul %1, %4, %cst {dimension_numbers = #tpu.dot_dimension_numbers<[1], [0], [0], [1], [0, 0, 1, 1], [], []>} : vector<2x32xbf16>, vector<32x64xbf16>, vector<2x64xf32> -> vector<2x64xf32>
    %c0_5 = arith.constant 0 : index
    %c0_6 = arith.constant 0 : index
    %6 = vector.load %arg4[%c0_5, %c0_6] : memref<32x64xbf16, #tpu.memory_space<vmem>>, vector<32x64xbf16>
    %cst_7 = arith.constant dense<0.000000e+00> : vector<2x64xf32>
    %7 = tpu.matmul %3, %6, %cst_7 {dimension_numbers = #tpu.dot_dimension_numbers<[1], [0], [0], [1], [0, 0, 1, 1], [], []>} : vector<2x32xbf16>, vector<32x64xbf16>, vector<2x64xf32> -> vector<2x64xf32>
    %8 = arith.addf %5, %7 : vector<2x64xf32>
    %cst_8 = arith.constant 0.000000e+00 : f32
    %9 = vector.broadcast %cst_8 : f32 to vector<2x64xf32>
    %10 = arith.maximumf %8, %9 : vector<2x64xf32>
    %11 = arith.truncf %10 : vector<2x64xf32> to vector<2x64xbf16>
    %c0_9 = arith.constant 0 : index
    %c0_10 = arith.constant 0 : index
    %12 = vector.load %arg5[%c0_9, %c0_10] : memref<64x64xbf16, #tpu.memory_space<vmem>>, vector<64x64xbf16>
    %cst_11 = arith.constant dense<0.000000e+00> : vector<2x64xf32>
    %13 = tpu.matmul %11, %12, %cst_11 {dimension_numbers = #tpu.dot_dimension_numbers<[1], [0], [0], [1], [0, 0, 1, 1], [], []>} : vector<2x64xbf16>, vector<64x64xbf16>, vector<2x64xf32> -> vector<2x64xf32>
    %cst_12 = arith.constant 0.000000e+00 : f32
    %14 = vector.broadcast %cst_12 : f32 to vector<2x64xf32>
    %15 = arith.maximumf %13, %14 : vector<2x64xf32>
    %16 = arith.truncf %15 : vector<2x64xf32> to vector<2x64xbf16>
    %c0_13 = arith.constant 0 : index
    %c0_14 = arith.constant 0 : index
    %17 = vector.load %arg6[%c0_13, %c0_14] : memref<64x128xbf16, #tpu.memory_space<vmem>>, vector<64x128xbf16>
    %cst_15 = arith.constant dense<0.000000e+00> : vector<2x128xf32>
    %18 = tpu.matmul %16, %17, %cst_15 {dimension_numbers = #tpu.dot_dimension_numbers<[1], [0], [0], [1], [0, 0, 1, 1], [], []>} : vector<2x64xbf16>, vector<64x128xbf16>, vector<2x128xf32> -> vector<2x128xf32>
    %cst_16 = arith.constant 0.000000e+00 : f32
    %19 = vector.broadcast %cst_16 : f32 to vector<2x128xf32>
    %20 = arith.maximumf %18, %19 : vector<2x128xf32>
    %c0_17 = arith.constant 0 : index
    %c0_18 = arith.constant 0 : index
    %21 = vector.load %arg7[%c0_17, %c0_18] : memref<2x128xf32, #tpu.memory_space<vmem>>, vector<2x128xf32>
    tpu.vector_store %arg7[%c0_17, %c0_18], %20 {strides = array<i32>} : memref<2x128xf32, #tpu.memory_space<vmem>>, vector<2x128xf32>,
    return
  }
  func.func @transform_0(%arg0: i32) -> (i32, i32) {
    %c0_i32 = arith.constant 0 : i32
    %c0_i32_0 = arith.constant 0 : i32
    return %arg0, %c0_i32 : i32, i32
  }
  func.func @transform_1(%arg0: i32) -> (i32, i32) {
    %c0_i32 = arith.constant 0 : i32
    %c0_i32_0 = arith.constant 0 : i32
    return %arg0, %c0_i32 : i32, i32
  }
  func.func @transform_2(%arg0: i32) -> (i32, i32) {
    %c0_i32 = arith.constant 0 : i32
    %c0_i32_0 = arith.constant 0 : i32
    %c0_i32_1 = arith.constant 0 : i32
    return %c0_i32, %c0_i32_0 : i32, i32
  }
  func.func @transform_3(%arg0: i32) -> (i32, i32) {
    %c0_i32 = arith.constant 0 : i32
    %c0_i32_0 = arith.constant 0 : i32
    %c0_i32_1 = arith.constant 0 : i32
    return %c0_i32, %c0_i32_0 : i32, i32
  }
  func.func @transform_4(%arg0: i32) -> (i32, i32) {
    %c0_i32 = arith.constant 0 : i32
    %c0_i32_0 = arith.constant 0 : i32
    %c0_i32_1 = arith.constant 0 : i32
    return %c0_i32, %c0_i32_0 : i32, i32
  }
  func.func @transform_5(%arg0: i32) -> (i32, i32) {
    %c0_i32 = arith.constant 0 : i32
    %c0_i32_0 = arith.constant 0 : i32
    %c0_i32_1 = arith.constant 0 : i32
    return %c0_i32, %c0_i32_0 : i32, i32
  }
  func.func @transform_6(%arg0: i32) -> (i32, i32) {
    %c0_i32 = arith.constant 0 : i32
    %c0_i32_0 = arith.constant 0 : i32
    return %arg0, %c0_i32 : i32, i32
  }
}

</mosaic_0001>

<llo_original>
// kernel: tpu_custom_call.1
$region0: #{tpu_custom_call.1}
  #allocation0 [shape = 'u32[]', space=smem, size = 0x4, offset = 0x4, fixed_abs, tag = 'smem constant byte address 0x4 - core index']
  #allocation1 [shape = 'u32[72,128]{1,0:T(1,128)}', space=vmem, size = 0x9000, scoped, tag = 'internal scratch']
  %s0 = inlined_call_operand.hbm [shape: f32[2,32], index: 0, kind: input, shape index: {}]
  %s1 = inlined_call_operand.hbm [shape: f32[2,32], index: 1, kind: input, shape index: {}]
  %s2 = inlined_call_operand.hbm [shape: bf16[32,64], index: 2, kind: input, shape index: {}]
  %s3 = inlined_call_operand.hbm [shape: bf16[32,64], index: 3, kind: input, shape index: {}]
  %s4 = inlined_call_operand.hbm [shape: bf16[64,64], index: 4, kind: input, shape index: {}]
  %s5 = inlined_call_operand.hbm [shape: bf16[64,128], index: 5, kind: input, shape index: {}]
  %s6 = inlined_call_operand.hbm [shape: f32[2,128], index: 6, kind: output, shape index: {}]
  %s7 = sld [smem:[#allocation0]]
  $region58: #{tpu_custom_call.1} parent=0
    _
  %s9 = ssub.s32 1, %s7
  %s10 = scalar_select 0, %s9, %s7
  $region1: #{tpu_custom_call.1} parent=0
    #allocation2 [shape = 'u8[1024]{0}', space=vmem, size = 0x400, scoped, tag = 'input window, operand 0, single buffered']
    #allocation3 [shape = 's32[1]{0}', space=sflag, size = 0x4, scoped, tag = 'scoped memory for tpu_custom_call.1']
    #allocation4 [shape = 's32[1]{0}', space=sflag, size = 0x4, scoped, tag = 'scoped memory for tpu_custom_call.1']
    #allocation5 [shape = 'u8[1024]{0}', space=vmem, size = 0x400, scoped, tag = 'input window, operand 1, single buffered']
    #allocation6 [shape = 's32[1]{0}', space=sflag, size = 0x4, scoped, tag = 'scoped memory for tpu_custom_call.1']
    #allocation7 [shape = 'u8[8192]{0}', space=vmem, size = 0x2000, scoped, tag = 'input window, operand 2, single buffered']
    #allocation8 [shape = 'u8[8192]{0}', space=vmem, size = 0x2000, scoped, tag = 'input window, operand 3, single buffered']
    #allocation9 [shape = 's32[1]{0}', space=sflag, size = 0x4, scoped, tag = 'scoped memory for tpu_custom_call.1']
    #allocation10 [shape = 'u8[16384]{0}', space=vmem, size = 0x4000, scoped, tag = 'input window, operand 4, single buffered']
    #allocation11 [shape = 'u8[16384]{0}', space=vmem, size = 0x4000, scoped, tag = 'input window, operand 5, single buffered']
    #allocation12 [shape = 's32[1]{0}', space=sflag, size = 0x4, scoped, tag = 'scoped memory for tpu_custom_call.1']
    #allocation13 [shape = 'u8[1024]{0}', space=vmem, size = 0x400, scoped, tag = 'output window, operand 0, single buffered']
    %11 = vsyncpa [#allocation3], 0
    %12 = vsyncpa [#allocation6], 0
    %13 = vsyncpa [#allocation9], 0
    %14 = vsyncpa [#allocation12], 0
    %15 = vsyncpa [#allocation4], 0
    // Predicated region
    $region2: #{tpu_custom_call.1} parent=1 // pred_check
      _
    $region3: #{tpu_custom_call.1} parent=1 // pred_check_branch
      %17 = sbr.rel (0) target = $region5
    $region4: #{tpu_custom_call.1} parent=1 // pred_region
      %19 = vsyncadd [#allocation3], 0
      %s21 = sshll.u32 %s0, 4
      %s22 = int_to_ptr.hbm [resolvable:$true] %s21
      %s23 = sshll.u32 [#allocation2], 4
      %s24 = int_to_ptr.vmem [resolvable:$true] %s23
      %26 = dma.hbm_to_vmem [thread:$0]  %s22, 32, %s24, [#allocation3]
    $region5: #{tpu_custom_call.1} parent=1 // pred_fallthru
      _
    // Predicated region
    $region6: #{tpu_custom_call.1} parent=1 // pred_check
      _
    $region7: #{tpu_custom_call.1} parent=1 // pred_check_branch
      %28 = sbr.rel (0) target = $region9
    $region8: #{tpu_custom_call.1} parent=1 // pred_region
      %30 = vsyncadd [#allocation6], 0
      %s32 = sshll.u32 %s1, 4
      %s33 = int_to_ptr.hbm [resolvable:$true] %s32
      %s34 = sshll.u32 [#allocation5], 4
      %s35 = int_to_ptr.vmem [resolvable:$true] %s34
      %37 = dma.hbm_to_vmem [thread:$0]  %s33, 32, %s35, [#allocation6]
    $region9: #{tpu_custom_call.1} parent=1 // pred_fallthru
      _
    // Predicated region
    $region10: #{tpu_custom_call.1} parent=1 // pred_check
      _
    $region11: #{tpu_custom_call.1} parent=1 // pred_check_branch
      %39 = sbr.rel (0) target = $region13
    $region12: #{tpu_custom_call.1} parent=1 // pred_region
      %41 = vsyncadd [#allocation6], 0
      %s42 = sshll.u32 %s2, 4
      %s43 = int_to_ptr.hbm [resolvable:$true] %s42
      %s44 = sshll.u32 [#allocation7], 4
      %s45 = int_to_ptr.vmem [resolvable:$true] %s44
      %50 = dma.hbm_to_vmem [thread:$0]  %s43, 256, %s45, [#allocation6], 64, 64, 4
    $region13: #{tpu_custom_call.1} parent=1 // pred_fallthru
      _
    // Predicated region
    $region14: #{tpu_custom_call.1} parent=1 // pred_check
      _
    $region15: #{tpu_custom_call.1} parent=1 // pred_check_branch
      %52 = sbr.rel (0) target = $region17
    $region16: #{tpu_custom_call.1} parent=1 // pred_region
      %54 = vsyncadd [#allocation9], 0
      %s55 = sshll.u32 %s3, 4
      %s56 = int_to_ptr.hbm [resolvable:$true] %s55
      %s57 = sshll.u32 [#allocation8], 4
      %s58 = int_to_ptr.vmem [resolvable:$true] %s57
      %63 = dma.hbm_to_vmem [thread:$0]  %s56, 256, %s58, [#allocation9], 64, 64, 4
    $region17: #{tpu_custom_call.1} parent=1 // pred_fallthru
      _
    // Predicated region
    $region18: #{tpu_custom_call.1} parent=1 // pred_check
      _
    $region19: #{tpu_custom_call.1} parent=1 // pred_check_branch
      %65 = sbr.rel (0) target = $region21
    $region20: #{tpu_custom_call.1} parent=1 // pred_region
      %67 = vsyncadd [#allocation9], 0
      %s68 = sshll.u32 %s4, 4
      %s69 = int_to_ptr.hbm [resolvable:$true] %s68
      %s70 = sshll.u32 [#allocation10], 4
      %s71 = int_to_ptr.vmem [resolvable:$true] %s70
      %76 = dma.hbm_to_vmem [thread:$0]  %s69, 512, %s71, [#allocation9], 64, 64, 4
    $region21: #{tpu_custom_call.1} parent=1 // pred_fallthru
      _
    // Predicated region
    $region22: #{tpu_custom_call.1} parent=1 // pred_check
      _
    $region23: #{tpu_custom_call.1} parent=1 // pred_check_branch
      %78 = sbr.rel (0) target = $region25
    $region24: #{tpu_custom_call.1} parent=1 // pred_region
      %80 = vsyncadd [#allocation12], 0
      %s81 = sshll.u32 %s5, 4
      %s82 = int_to_ptr.hbm [resolvable:$true] %s81
      %s83 = sshll.u32 [#allocation11], 4
      %s84 = int_to_ptr.vmem [resolvable:$true] %s83
      %89 = dma.hbm_to_vmem [thread:$0]  %s82, 512, %s84, [#allocation12], 64, 64, 4
    $region25: #{tpu_custom_call.1} parent=1 // pred_fallthru
      _
    // Predicated region
    $region26: #{tpu_custom_call.1} parent=1 // pred_check
      _
    $region27: #{tpu_custom_call.1} parent=1 // pred_check_branch
      %91 = sbr.rel (0) target = $region29
    $region28: #{tpu_custom_call.1} parent=1 // pred_region
      %93 = dma.done [#allocation3], 32
    $region29: #{tpu_custom_call.1} parent=1 // pred_fallthru
      _
    // Predicated region
    $region30: #{tpu_custom_call.1} parent=1 // pred_check
      _
    $region31: #{tpu_custom_call.1} parent=1 // pred_check_branch
      %95 = sbr.rel (0) target = $region33
    $region32: #{tpu_custom_call.1} parent=1 // pred_region
      %97 = dma.done [#allocation6], 32
    $region33: #{tpu_custom_call.1} parent=1 // pred_fallthru
      _
    // Predicated region
    $region34: #{tpu_custom_call.1} parent=1 // pred_check
      _
    $region35: #{tpu_custom_call.1} parent=1 // pred_check_branch
      %99 = sbr.rel (0) target = $region37
    $region36: #{tpu_custom_call.1} parent=1 // pred_region
      %101 = dma.done [#allocation6], 256
    $region37: #{tpu_custom_call.1} parent=1 // pred_fallthru
      _
    // Predicated region
    $region38: #{tpu_custom_call.1} parent=1 // pred_check
      _
    $region39: #{tpu_custom_call.1} parent=1 // pred_check_branch
      %103 = sbr.rel (0) target = $region41
    $region40: #{tpu_custom_call.1} parent=1 // pred_region
      %105 = dma.done [#allocation9], 256
    $region41: #{tpu_custom_call.1} parent=1 // pred_fallthru
      _
    // Predicated region
    $region42: #{tpu_custom_call.1} parent=1 // pred_check
      _
    $region43: #{tpu_custom_call.1} parent=1 // pred_check_branch
      %107 = sbr.rel (0) target = $region45
    $region44: #{tpu_custom_call.1} parent=1 // pred_region
      %109 = dma.done [#allocation9], 512
    $region45: #{tpu_custom_call.1} parent=1 // pred_fallthru
      _
    // Predicated region
    $region46: #{tpu_custom_call.1} parent=1 // pred_check
      _
    $region47: #{tpu_custom_call.1} parent=1 // pred_check_branch
      %111 = sbr.rel (0) target = $region49
    $region48: #{tpu_custom_call.1} parent=1 // pred_region
      %113 = dma.done [#allocation12], 512
    $region49: #{tpu_custom_call.1} parent=1 // pred_fallthru
      _
    %v115 = vld [vmem:[#allocation2] sm:$0x3]
    %v116 = vpack.c.bf16 %v115, %v115
    %v117 = vld [vmem:[#allocation5] sm:$0x3]
    %v118 = vpack.c.bf16 %v117, %v117
    %v119 = vld [vmem:[#allocation7] sm:$0xf]
    %v120 = vld [vmem:[#allocation7 + $0x4] sm:$0xf]
    %v121 = vld [vmem:[#allocation7 + $0x8] sm:$0xf]
    %v122 = vld [vmem:[#allocation7 + $0xc] sm:$0xf]
    %v123 = vld [vmem:[#allocation8] sm:$0xf]
    %v124 = vld [vmem:[#allocation8 + $0x4] sm:$0xf]
    %v125 = vld [vmem:[#allocation8 + $0x8] sm:$0xf]
    %v126 = vld [vmem:[#allocation8 + $0xc] sm:$0xf]
    %v131 = vunpack.c.l.b16 %v123
    %v132 = vunpack.c.l.b16 %v124
    %v133 = vunpack.c.l.b16 %v125
    %v134 = vunpack.c.l.b16 %v126
    %v135 = vpack.c.b16 %v132, %v131
    %v136 = vpack.c.b16 %v134, %v133
    %vm139 = vcmask 261120
    %v141 = vsel %vm139, %v118, 0
    %143 = vmatpush.bf16.msra.mxu0 0
    %144 = vmatpush.bf16.msra.mxu0 0
    %145 = vmatpush.bf16.msra.mxu0 0
    %146 = vmatpush.bf16.msra.mxu0 0
    %147 = vmatpush.bf16.msra.mxu0 0
    %148 = vmatpush.bf16.msra.mxu0 0
    %149 = vmatpush.bf16.msra.mxu0 %v136
    %150 = vmatpush.bf16.msra.mxu0 %v135
    %151 = vmatmul.bf16.gmra.mxu0 %v141
    %v152 = vpop.f32.mrf.mxu0
    %v153 = vadd.f32 0.0, %v152
    %v154 = vpop.f32.mrf.mxu0
    %155 = vdwg.mxu0
    %v160 = vunpack.c.l.b16 %v119
    %v161 = vunpack.c.l.b16 %v120
    %v162 = vunpack.c.l.b16 %v121
    %v163 = vunpack.c.l.b16 %v122
    %v164 = vpack.c.b16 %v161, %v160
    %v165 = vpack.c.b16 %v163, %v162
    %v169 = vsel %vm139, %v116, 0
    %171 = vmatpush.bf16.msra.mxu0 0
    %172 = vmatpush.bf16.msra.mxu0 0
    %173 = vmatpush.bf16.msra.mxu0 0
    %174 = vmatpush.bf16.msra.mxu0 0
    %175 = vmatpush.bf16.msra.mxu0 0
    %176 = vmatpush.bf16.msra.mxu0 0
    %177 = vmatpush.bf16.msra.mxu0 %v165
    %178 = vmatpush.bf16.msra.mxu0 %v164
    %179 = vmatmul.bf16.gmra.mxu0 %v169
    %v180 = vpop.f32.mrf.mxu0
    %v181 = vadd.f32 %v153, %v180
    %v182 = vpop.f32.mrf.mxu0
    %183 = vdwg.mxu0
    %v184 = vmax.f32 %v181, 0.0
    %v185 = vpack.c.bf16 %v184, %v184
    %v186 = vld [vmem:[#allocation10] sm:$0xf]
    %v187 = vld [vmem:[#allocation10 + $0x4] sm:$0xf]
    %v188 = vld [vmem:[#allocation10 + $0x8] sm:$0xf]
    %v189 = vld [vmem:[#allocation10 + $0xc] sm:$0xf]
    %v190 = vld [vmem:[#allocation10 + $0x10] sm:$0xf]
    %v191 = vld [vmem:[#allocation10 + $0x14] sm:$0xf]
    %v192 = vld [vmem:[#allocation10 + $0x18] sm:$0xf]
    %v193 = vld [vmem:[#allocation10 + $0x1c] sm:$0xf]
    %v202 = vunpack.c.l.b16 %v186
    %v203 = vunpack.c.l.b16 %v187
    %v204 = vunpack.c.l.b16 %v188
    %v205 = vunpack.c.l.b16 %v189
    %v206 = vunpack.c.l.b16 %v190
    %v207 = vunpack.c.l.b16 %v191
    %v208 = vunpack.c.l.b16 %v192
    %v209 = vunpack.c.l.b16 %v193
    %v210 = vpack.c.b16 %v203, %v202
    %v211 = vpack.c.b16 %v205, %v204
    %v212 = vpack.c.b16 %v207, %v206
    %v213 = vpack.c.b16 %v209, %v208
    %vm218 = vcmask 523264
    %v220 = vsel %vm218, %v185, 0
    %222 = vmatpush.bf16.msra.mxu0 0
    %223 = vmatpush.bf16.msra.mxu0 0
    %224 = vmatpush.bf16.msra.mxu0 0
    %225 = vmatpush.bf16.msra.mxu0 0
    %226 = vmatpush.bf16.msra.mxu0 %v213
    %227 = vmatpush.bf16.msra.mxu0 %v212
    %228 = vmatpush.bf16.msra.mxu0 %v211
    %229 = vmatpush.bf16.msra.mxu0 %v210
    %230 = vmatmul.bf16.gmra.mxu0 %v220
    %v231 = vpop.f32.mrf.mxu0
    %v232 = vadd.f32 0.0, %v231
    %v233 = vpop.f32.mrf.mxu0
    %234 = vdwg.mxu0
    %v235 = vmax.f32 %v232, 0.0
    %v236 = vpack.c.bf16 %v235, %v235
    %v237 = vld [vmem:[#allocation11] sm:$0xf]
    %v238 = vld [vmem:[#allocation11 + $0x4] sm:$0xf]
    %v239 = vld [vmem:[#allocation11 + $0x8] sm:$0xf]
    %v240 = vld [vmem:[#allocation11 + $0xc] sm:$0xf]
    %v241 = vld [vmem:[#allocation11 + $0x10] sm:$0xf]
    %v242 = vld [vmem:[#allocation11 + $0x14] sm:$0xf]
    %v243 = vld [vmem:[#allocation11 + $0x18] sm:$0xf]
    %v244 = vld [vmem:[#allocation11 + $0x1c] sm:$0xf]
    %v253 = vunpack.c.l.b16 %v237
    %v254 = vunpack.c.l.b16 %v238
    %v255 = vunpack.c.l.b16 %v239
    %v256 = vunpack.c.l.b16 %v240
    %v257 = vunpack.c.l.b16 %v241
    %v258 = vunpack.c.l.b16 %v242
    %v259 = vunpack.c.l.b16 %v243
    %v260 = vunpack.c.l.b16 %v244
    %v261 = vpack.c.b16 %v254, %v253
    %v262 = vpack.c.b16 %v256, %v255
    %v263 = vpack.c.b16 %v258, %v257
    %v264 = vpack.c.b16 %v260, %v259
    %v270 = vsel %vm218, %v236, 0
    %272 = vmatpush.bf16.msra.mxu0 0
    %273 = vmatpush.bf16.msra.mxu0 0
    %274 = vmatpush.bf16.msra.mxu0 0
    %275 = vmatpush.bf16.msra.mxu0 0
    %276 = vmatpush.bf16.msra.mxu0 %v264
    %277 = vmatpush.bf16.msra.mxu0 %v263
    %278 = vmatpush.bf16.msra.mxu0 %v262
    %279 = vmatpush.bf16.msra.mxu0 %v261
    %280 = vmatmul.bf16.gmra.mxu0 %v270
    %v281 = vpop.f32.mrf.mxu0
    %v282 = vadd.f32 0.0, %v281
    %v283 = vpop.f32.mrf.mxu0
    %284 = vdwg.mxu0
    %v285 = vmax.f32 %v282, 0.0
    %286 = vst [vmem:[#allocation13] sm:$0x3] %v285
    // Predicated region
    $region50: #{tpu_custom_call.1} parent=1 // pred_check
      _
    $region51: #{tpu_custom_call.1} parent=1 // pred_check_branch
      %288 = sbr.rel (0) target = $region53
    $region52: #{tpu_custom_call.1} parent=1 // pred_region
      %290 = vsyncadd [#allocation4], 0
      %s292 = sshll.u32 [#allocation13], 4
      %s293 = int_to_ptr.vmem [resolvable:$true] %s292
      %s294 = sshll.u32 %s6, 4
      %s295 = int_to_ptr.hbm [resolvable:$true] %s294
      %297 = dma.vmem_to_hbm [thread:$0]  %s293, 32, %s295, [#allocation4]
    $region53: #{tpu_custom_call.1} parent=1 // pred_fallthru
      _
    // Predicated region
    $region54: #{tpu_custom_call.1} parent=1 // pred_check
      _
    $region55: #{tpu_custom_call.1} parent=1 // pred_check_branch
      %299 = sbr.rel (0) target = $region57
    $region56: #{tpu_custom_call.1} parent=1 // pred_region
      %301 = dma.done [#allocation4], 32
    $region57: #{tpu_custom_call.1} parent=1 // pred_fallthru
      _
    %302 = vsyncpa [#allocation3], 1
    %303 = vsyncpa [#allocation6], 1
    %304 = vsyncpa [#allocation9], 1
    %305 = vsyncpa [#allocation12], 1
    %306 = vsyncpa [#allocation4], 1

</llo_original>
